<compile_context>
chip_gen: v6e
topology: v6e:2x2x1
jax: 0.10.0
libtpu: 0.0.40
codegen_flags: <defaults>
</compile_context>

<pallas_src>
import functools

import jax
import jax.numpy as jnp
import numpy as np
from jax import lax
from jax.experimental import pallas as pl
from jax.experimental.pallas import tpu as pltpu


def _decoder_block_kernel(q_ref, kT_ref, v_ref, idx_ref,
                          wqk_ref, wvo_ref, affine_ref, out_ref, *,
                          L, LK, DV, window, sentinel, out_width,
                          ln_eps, matmul_dtype, approx_recip):
    """One grid step = one batch element.

    q_ref:   (L,  DQ)       raw queries (also the residual source)
    kT_ref:  (DQ, LK)       raw keys, pre-transposed in the wrapper
    v_ref:   (LK, DV)       raw values
    idx_ref: (L,  W)  int32 gather indices; == sentinel means padding
    wqk_ref: (2, DQ, DQ)    [0] = Wq^T (right-mult), [1] = Wk (left-mult of K^T)
    wvo_ref: (2, DV, DV)    [0] = Wv^T, [1] = Wo^T  (right-mult)
    affine_ref: (3, DV)     rows: fc_out bias, LayerNorm gamma, LayerNorm beta
    out_ref: (L, out_width) lane-dense packed output:
             [:, :DV] block output, [:, DV:DV+W] attention weights, rest zeros
    """
    def mm(a, b):
        return jnp.dot(a.astype(matmul_dtype), b.astype(matmul_dtype),
                       preferred_element_type=jnp.float32)

    q = q_ref[...]                                       # (L, DQ)
    qp = mm(q, wqk_ref[0])                               # (L, DQ)   query proj
    kpT = mm(wqk_ref[1], kT_ref[...])                    # (DQ, LK)  key proj, already transposed
    vp = mm(v_ref[...], wvo_ref[0])                      # (LK, DV)  value proj
    scores = mm(qp, kpT)                                 # (L, LK)   q·k against every key row
    idx = idx_ref[...]                                   # (L, W)

    key_iota = lax.broadcasted_iota(jnp.int32, (L, LK), 1)

    # One-hot gather planes, built exactly ONCE per window slot and reused for
    # both the banded-energy gather and the probability scatter. The appended
    # zero key/value row of the reference (index == sentinel) never matches
    # key_iota, so it contributes zero energy / zero value, matching the
    # reference's zero row exactly.
    onehots = []
    e_cols = []
    for w in range(window):                              # static unroll; W is small
        oh = (key_iota == idx[:, w:w + 1]).astype(jnp.float32)        # (L, LK)
        onehots.append(oh)
        e_cols.append(jnp.sum(oh * scores, axis=-1, keepdims=True))   # (L, 1)
    energy = jnp.concatenate(e_cols, axis=-1)            # (L, W)  single assembly, no scratch

    # masked_fill (sentinel slots) + softmax over the window.
    energy = jnp.where(idx == sentinel, jnp.float32(-1e20), energy)
    m = jnp.max(energy, axis=-1, keepdims=True)
    e = jnp.exp(energy - m)
    denom = jnp.sum(e, axis=-1, keepdims=True)
    p = e * pl.reciprocal(denom, approx=approx_recip)    # (L, W)

    # Scatter the probabilities back onto key positions (binary-tree sum,
    # reusing the one-hot planes), then ONE (L, LK) @ (LK, DV) matmul.
    # Duplicate indices accumulate, sentinel slots scatter to nothing.
    terms = [onehots[w] * p[:, w:w + 1] for w in range(window)]
    while len(terms) > 1:
        nxt = [terms[j] + terms[j + 1] for j in range(0, len(terms) - 1, 2)]
        if len(terms) % 2:
            nxt.append(terms[-1])
        terms = nxt
    p_scatter = terms[0]                                 # (L, LK)
    attn_out = mm(p_scatter, vp)                         # (L, DV)

    # fc_out + residual (first DV features of the raw query) + LayerNorm.
    # Dropout: identity (inference).
    fc = mm(attn_out, wvo_ref[1]) + affine_ref[0:1]      # (L, DV)
    resid = fc + q[:, :DV]
    mu = jnp.mean(resid, axis=-1, keepdims=True)
    var = jnp.mean(jnp.square(resid - mu), axis=-1, keepdims=True)
    normed = (resid - mu) * lax.rsqrt(var + ln_eps)
    block_out = normed * affine_ref[1:2] + affine_ref[2:3]

    # Lane-dense packed output: one full-width (128-lane) unmasked store.
    pad = out_width - DV - window
    pieces = [block_out.astype(out_ref.dtype), p.astype(out_ref.dtype)]
    if pad:
        pieces.append(jnp.zeros((L, pad), out_ref.dtype))
    out_ref[...] = jnp.concatenate(pieces, axis=-1)


def stack_params(params):
    """Pre-orient + stack the parameters ONCE (outside any per-call path)."""
    # wqk[0] = Wq^T (queries right-multiply); wqk[1] = Wk (left-multiplies K^T,
    # so the projected keys come out already transposed -> no in-kernel vxpose).
    wqk = jnp.stack([params["wq"].T, params["wk"]], axis=0)               # (2, DQ, DQ)
    wvo = jnp.stack([params["wv"].T, params["wo"].T], axis=0)             # (2, DV, DV)
    affine = jnp.stack([params["bo"], params["gamma"], params["beta"]], axis=0)  # (3, DV)
    return wqk, wvo, affine


def decoder_block_forward(query, value, key_arr, trg_mask, stacked_params, *,
                          longest_window, matmul_dtype=jnp.float32,
                          approx_recip=False):
    """query: (N, L, 2E), value: (N, LK, E//2), key: (N, LK, 2E), trg_mask: (N, L, W)."""
    N, L, DQ = query.shape
    LK = key_arr.shape[1]
    DV = value.shape[2]
    W = trg_mask.shape[2]
    assert LK == longest_window and value.shape[1] == LK
    out_width = ((DV + W + 127) // 128) * 128            # lane-dense output slab

    wqk, wvo, affine = stacked_params

    # Pre-transpose the keys ONCE at the HBM level (plain XLA op outside the
    # kernel) so the in-kernel projections/scores need no per-step transpose.
    key_t = jnp.swapaxes(key_arr, 1, 2).reshape(N * DQ, LK)

    kernel = functools.partial(
        _decoder_block_kernel, L=L, LK=LK, DV=DV, window=W,
        sentinel=longest_window, out_width=out_width, ln_eps=1e-5,
        matmul_dtype=matmul_dtype, approx_recip=approx_recip)

    packed = pl.pallas_call(
        kernel,
        out_shape=jax.ShapeDtypeStruct((N * L, out_width), jnp.float32),
        grid=(N,),                                       # one batch element per step
        in_specs=[
            pl.BlockSpec((L, DQ), lambda i: (i, 0)),     # query  (batch-major rows)
            pl.BlockSpec((DQ, LK), lambda i: (i, 0)),    # keys, pre-transposed
            pl.BlockSpec((LK, DV), lambda i: (i, 0)),    # values
            pl.BlockSpec((L, W), lambda i: (i, 0)),      # gather indices
            pl.BlockSpec((2, DQ, DQ), lambda i: (0, 0, 0)),   # [Wq^T, Wk]
            pl.BlockSpec((2, DV, DV), lambda i: (0, 0, 0)),   # [Wv^T, Wo^T]
            pl.BlockSpec((3, DV), lambda i: (0, 0)),          # [b_fc, gamma, beta]
        ],
        out_specs=pl.BlockSpec((L, out_width), lambda i: (i, 0)),
        compiler_params=pltpu.CompilerParams(
            dimension_semantics=("parallel",),
            vmem_limit_bytes=32 * 1024 * 1024),
    )(query.reshape(N * L, DQ), key_t, value.reshape(N * LK, DV),
      trg_mask.reshape(N * L, W).astype(jnp.int32), wqk, wvo, affine)

    out = packed[:, :DV].reshape(N, L, DV)
    attn = packed[:, DV:DV + W].reshape(N, L, W)
    return out, attn


def reference_forward(query, value, key_arr, trg_mask, params, *, longest_window):
    """Pure-JAX mirror of the PyTorch forward (heads=1), for verification."""
    N, L, DQ = query.shape
    DV = value.shape[2]
    W = trg_mask.shape[2]
    hp = lax.Precision.HIGHEST
    vp = jnp.einsum('nld,ed->nle', value, params['wv'], precision=hp)
    kp = jnp.einsum('nld,ed->nle', key_arr, params['wk'], precision=hp)
    qp = jnp.einsum('nld,ed->nle', query, params['wq'], precision=hp)
    k_pad = jnp.concatenate([kp, jnp.zeros((N, 1, DQ), jnp.float32)], axis=1)
    v_pad = jnp.concatenate([vp, jnp.zeros((N, 1, DV), jnp.float32)], axis=1)
    idx = trg_mask.reshape(N, L * W)
    gk = jnp.take_along_axis(k_pad, idx[..., None], axis=1).reshape(N, L, W, DQ)
    gv = jnp.take_along_axis(v_pad, idx[..., None], axis=1).reshape(N, L, W, DV)
    energy = jnp.einsum('nld,nlwd->nlw', qp, gk, precision=hp)
    energy = jnp.where(trg_mask == longest_window, jnp.float32(-1e20), energy)
    p = jax.nn.softmax(energy, axis=-1)
    out_attn = jnp.einsum('nlw,nlwd->nld', p, gv, precision=hp)
    fc = jnp.einsum('nld,ed->nle', out_attn, params['wo'], precision=hp) + params['bo']
    resid = fc + query[:, :, :DV]
    mu = resid.mean(-1, keepdims=True)
    var = ((resid - mu) ** 2).mean(-1, keepdims=True)
    out = (resid - mu) / jnp.sqrt(var + 1e-5) * params['gamma'] + params['beta']
    return out, p


if __name__ == "__main__":
    root = jax.random.PRNGKey(0)
    ks = jax.random.split(root, 9)

    # Small, shape-consistent configuration (heads = 1).
    E = 16                       # embed_size
    DQ, DV = 2 * E, E // 2       # query/key feature dim, value/output feature dim
    N, L, W = 2, 8, 8            # batch, query length, window width
    LONGEST_WINDOW = 16          # scaled down from 600; equals key_len/value_len
    LK = LONGEST_WINDOW

    query = jax.random.normal(ks[0], (N, L, DQ), jnp.float32)
    key_arr = jax.random.normal(ks[1], (N, LK, DQ), jnp.float32)
    value = jax.random.normal(ks[2], (N, LK, DV), jnp.float32)
    # gather indices in [0, LK]; value LK is the padding sentinel (zero row)
    trg_mask = jax.random.randint(ks[3], (N, L, W), 0, LK + 1, dtype=jnp.int32)

    params = dict(
        wq=0.1 * jax.random.normal(ks[4], (DQ, DQ), jnp.float32),
        wk=0.1 * jax.random.normal(ks[5], (DQ, DQ), jnp.float32),
        wv=0.1 * jax.random.normal(ks[6], (DV, DV), jnp.float32),
        wo=0.1 * jax.random.normal(ks[7], (DV, DV), jnp.float32),
        bo=0.01 * jax.random.normal(ks[8], (DV,), jnp.float32),
        gamma=jnp.ones((DV,), jnp.float32),   # nn.LayerNorm default init
        beta=jnp.zeros((DV,), jnp.float32),
    )
    stacked = stack_params(params)             # pre-orient + stack once

    # f32 MXU operands + exact reciprocal here so the 1e-3 check stays tight;
    # production knobs: matmul_dtype=jnp.bfloat16 (v6e/v7x), approx_recip=True.
    out, attn = decoder_block_forward(query, value, key_arr, trg_mask, stacked,
                                      longest_window=LONGEST_WINDOW)
    jax.block_until_ready((out, attn))

    out_ref, attn_ref = reference_forward(query, value, key_arr, trg_mask, params,
                                          longest_window=LONGEST_WINDOW)
    np.testing.assert_allclose(np.asarray(out), np.asarray(out_ref), rtol=1e-3, atol=1e-3)
    np.testing.assert_allclose(np.asarray(attn), np.asarray(attn_ref), rtol=1e-3, atol=1e-3)

    print("KERNEL_OK")
</pallas_src>

<mosaic_0001>
module attributes {stable_mosaic.version = 11 : i64} {
  func.func @_decoder_block_kernel(%arg0: i32, %arg1: memref<8x32xf32, #tpu.memory_space<vmem>>, %arg2: memref<32x16xf32, #tpu.memory_space<vmem>>, %arg3: memref<16x8xf32, #tpu.memory_space<vmem>>, %arg4: memref<8x8xi32, #tpu.memory_space<vmem>>, %arg5: memref<2x32x32xf32, #tpu.memory_space<vmem>>, %arg6: memref<2x8x8xf32, #tpu.memory_space<vmem>>, %arg7: memref<3x8xf32, #tpu.memory_space<vmem>>, %arg8: memref<8x128xf32, #tpu.memory_space<vmem>>) attributes {dimension_semantics = [#tpu.dimension_semantics<parallel>], iteration_bounds = array<i64: 2>, scalar_prefetch = 0 : i64, scratch_operands = 0 : i64, tpu.core_type = #tpu.core_type<tc>, window_params = [{transform_indices = @transform_0, window_bounds = array<i64: 8, 32>}, {transform_indices = @transform_1, window_bounds = array<i64: 32, 16>}, {transform_indices = @transform_2, window_bounds = array<i64: 16, 8>}, {transform_indices = @transform_3, window_bounds = array<i64: 8, 8>}, {pipeline_mode = #tpu.pipeline_mode<synchronous>, transform_indices = @transform_4, window_bounds = array<i64: 2, 32, 32>}, {pipeline_mode = #tpu.pipeline_mode<synchronous>, transform_indices = @transform_5, window_bounds = array<i64: 2, 8, 8>}, {pipeline_mode = #tpu.pipeline_mode<synchronous>, transform_indices = @transform_6, window_bounds = array<i64: 3, 8>}, {transform_indices = @transform_7, window_bounds = array<i64: 8, 128>}]} {
    %c0 = arith.constant 0 : index
    %c0_0 = arith.constant 0 : index
    %0 = vector.load %arg1[%c0, %c0_0] : memref<8x32xf32, #tpu.memory_space<vmem>>, vector<8x32xf32>
    %c0_1 = arith.constant 0 : index
    %c0_2 = arith.constant 0 : index
    %c0_3 = arith.constant 0 : index
    %1 = vector.load %arg5[%c0_1, %c0_2, %c0_3] : memref<2x32x32xf32, #tpu.memory_space<vmem>>, vector<1x32x32xf32>
    %2 = vector.shape_cast %1 : vector<1x32x32xf32> to vector<32x32xf32>
    %cst = arith.constant dense<0.000000e+00> : vector<8x32xf32>
    %3 = tpu.matmul %0, %2, %cst {dimension_numbers = #tpu.dot_dimension_numbers<[1], [0], [0], [1], [0, 0, 1, 1], [], []>} : vector<8x32xf32>, vector<32x32xf32>, vector<8x32xf32> -> vector<8x32xf32>
    %c1 = arith.constant 1 : index
    %c0_4 = arith.constant 0 : index
    %c0_5 = arith.constant 0 : index
    %4 = vector.load %arg5[%c1, %c0_4, %c0_5] : memref<2x32x32xf32, #tpu.memory_space<vmem>>, vector<1x32x32xf32>
    %5 = vector.shape_cast %4 : vector<1x32x32xf32> to vector<32x32xf32>
    %c0_6 = arith.constant 0 : index
    %c0_7 = arith.constant 0 : index
    %6 = vector.load %arg2[%c0_6, %c0_7] : memref<32x16xf32, #tpu.memory_space<vmem>>, vector<32x16xf32>
    %cst_8 = arith.constant dense<0.000000e+00> : vector<32x16xf32>
    %7 = tpu.matmul %5, %6, %cst_8 {dimension_numbers = #tpu.dot_dimension_numbers<[1], [0], [0], [1], [0, 0, 1, 1], [], []>} : vector<32x32xf32>, vector<32x16xf32>, vector<32x16xf32> -> vector<32x16xf32>
    %c0_9 = arith.constant 0 : index
    %c0_10 = arith.constant 0 : index
    %8 = vector.load %arg3[%c0_9, %c0_10] : memref<16x8xf32, #tpu.memory_space<vmem>>, vector<16x8xf32>
    %c0_11 = arith.constant 0 : index
    %c0_12 = arith.constant 0 : index
    %c0_13 = arith.constant 0 : index
    %9 = vector.load %arg6[%c0_11, %c0_12, %c0_13] : memref<2x8x8xf32, #tpu.memory_space<vmem>>, vector<1x8x8xf32>
    %10 = vector.shape_cast %9 : vector<1x8x8xf32> to vector<8x8xf32>
    %cst_14 = arith.constant dense<0.000000e+00> : vector<16x8xf32>
    %11 = tpu.matmul %8, %10, %cst_14 {dimension_numbers = #tpu.dot_dimension_numbers<[1], [0], [0], [1], [0, 0, 1, 1], [], []>} : vector<16x8xf32>, vector<8x8xf32>, vector<16x8xf32> -> vector<16x8xf32>
    %cst_15 = arith.constant dense<0.000000e+00> : vector<8x16xf32>
    %12 = tpu.matmul %3, %7, %cst_15 {dimension_numbers = #tpu.dot_dimension_numbers<[1], [0], [0], [1], [0, 0, 1, 1], [], []>} : vector<8x32xf32>, vector<32x16xf32>, vector<8x16xf32> -> vector<8x16xf32>
    %c0_16 = arith.constant 0 : index
    %c0_17 = arith.constant 0 : index
    %13 = vector.load %arg4[%c0_16, %c0_17] : memref<8x8xi32, #tpu.memory_space<vmem>>, vector<8x8xi32>
    %14 = tpu.iota {dimensions = array<i32: 1>} : vector<8x16xi32>
    %15 = vector.extract_strided_slice %13 {offsets = [0, 0], sizes = [8, 1], strides = [1, 1]} : vector<8x8xi32> to vector<8x1xi32>
    %16 = vector.broadcast %15 : vector<8x1xi32> to vector<8x16xi32>
    %17 = arith.cmpi eq, %14, %16 : vector<8x16xi32>
    %18 = arith.extui %17 : vector<8x16xi1> to vector<8x16xi32>
    %19 = arith.sitofp %18 : vector<8x16xi32> to vector<8x16xf32>
    %20 = arith.mulf %19, %12 : vector<8x16xf32>
    %cst_18 = arith.constant dense<0.000000e+00> : vector<8xf32>
    %21 = vector.multi_reduction <add>, %20, %cst_18 [1] : vector<8x16xf32> to vector<8xf32>
    %22 = vector.shape_cast %21 : vector<8xf32> to vector<8x1xf32>
    %23 = vector.extract_strided_slice %13 {offsets = [0, 1], sizes = [8, 1], strides = [1, 1]} : vector<8x8xi32> to vector<8x1xi32>
    %24 = vector.broadcast %23 : vector<8x1xi32> to vector<8x16xi32>
    %25 = arith.cmpi eq, %14, %24 : vector<8x16xi32>
    %26 = arith.extui %25 : vector<8x16xi1> to vector<8x16xi32>
    %27 = arith.sitofp %26 : vector<8x16xi32> to vector<8x16xf32>
    %28 = arith.mulf %27, %12 : vector<8x16xf32>
    %cst_19 = arith.constant dense<0.000000e+00> : vector<8xf32>
    %29 = vector.multi_reduction <add>, %28, %cst_19 [1] : vector<8x16xf32> to vector<8xf32>
    %30 = vector.shape_cast %29 : vector<8xf32> to vector<8x1xf32>
    %31 = vector.extract_strided_slice %13 {offsets = [0, 2], sizes = [8, 1], strides = [1, 1]} : vector<8x8xi32> to vector<8x1xi32>
    %32 = vector.broadcast %31 : vector<8x1xi32> to vector<8x16xi32>
    %33 = arith.cmpi eq, %14, %32 : vector<8x16xi32>
    %34 = arith.extui %33 : vector<8x16xi1> to vector<8x16xi32>
    %35 = arith.sitofp %34 : vector<8x16xi32> to vector<8x16xf32>
    %36 = arith.mulf %35, %12 : vector<8x16xf32>
    %cst_20 = arith.constant dense<0.000000e+00> : vector<8xf32>
    %37 = vector.multi_reduction <add>, %36, %cst_20 [1] : vector<8x16xf32> to vector<8xf32>
    %38 = vector.shape_cast %37 : vector<8xf32> to vector<8x1xf32>
    %39 = vector.extract_strided_slice %13 {offsets = [0, 3], sizes = [8, 1], strides = [1, 1]} : vector<8x8xi32> to vector<8x1xi32>
    %40 = vector.broadcast %39 : vector<8x1xi32> to vector<8x16xi32>
    %41 = arith.cmpi eq, %14, %40 : vector<8x16xi32>
    %42 = arith.extui %41 : vector<8x16xi1> to vector<8x16xi32>
    %43 = arith.sitofp %42 : vector<8x16xi32> to vector<8x16xf32>
    %44 = arith.mulf %43, %12 : vector<8x16xf32>
    %cst_21 = arith.constant dense<0.000000e+00> : vector<8xf32>
    %45 = vector.multi_reduction <add>, %44, %cst_21 [1] : vector<8x16xf32> to vector<8xf32>
    %46 = vector.shape_cast %45 : vector<8xf32> to vector<8x1xf32>
    %47 = vector.extract_strided_slice %13 {offsets = [0, 4], sizes = [8, 1], strides = [1, 1]} : vector<8x8xi32> to vector<8x1xi32>
    %48 = vector.broadcast %47 : vector<8x1xi32> to vector<8x16xi32>
    %49 = arith.cmpi eq, %14, %48 : vector<8x16xi32>
    %50 = arith.extui %49 : vector<8x16xi1> to vector<8x16xi32>
    %51 = arith.sitofp %50 : vector<8x16xi32> to vector<8x16xf32>
    %52 = arith.mulf %51, %12 : vector<8x16xf32>
    %cst_22 = arith.constant dense<0.000000e+00> : vector<8xf32>
    %53 = vector.multi_reduction <add>, %52, %cst_22 [1] : vector<8x16xf32> to vector<8xf32>
    %54 = vector.shape_cast %53 : vector<8xf32> to vector<8x1xf32>
    %55 = vector.extract_strided_slice %13 {offsets = [0, 5], sizes = [8, 1], strides = [1, 1]} : vector<8x8xi32> to vector<8x1xi32>
    %56 = vector.broadcast %55 : vector<8x1xi32> to vector<8x16xi32>
    %57 = arith.cmpi eq, %14, %56 : vector<8x16xi32>
    %58 = arith.extui %57 : vector<8x16xi1> to vector<8x16xi32>
    %59 = arith.sitofp %58 : vector<8x16xi32> to vector<8x16xf32>
    %60 = arith.mulf %59, %12 : vector<8x16xf32>
    %cst_23 = arith.constant dense<0.000000e+00> : vector<8xf32>
    %61 = vector.multi_reduction <add>, %60, %cst_23 [1] : vector<8x16xf32> to vector<8xf32>
    %62 = vector.shape_cast %61 : vector<8xf32> to vector<8x1xf32>
    %63 = vector.extract_strided_slice %13 {offsets = [0, 6], sizes = [8, 1], strides = [1, 1]} : vector<8x8xi32> to vector<8x1xi32>
    %64 = vector.broadcast %63 : vector<8x1xi32> to vector<8x16xi32>
    %65 = arith.cmpi eq, %14, %64 : vector<8x16xi32>
    %66 = arith.extui %65 : vector<8x16xi1> to vector<8x16xi32>
    %67 = arith.sitofp %66 : vector<8x16xi32> to vector<8x16xf32>
    %68 = arith.mulf %67, %12 : vector<8x16xf32>
    %cst_24 = arith.constant dense<0.000000e+00> : vector<8xf32>
    %69 = vector.multi_reduction <add>, %68, %cst_24 [1] : vector<8x16xf32> to vector<8xf32>
    %70 = vector.shape_cast %69 : vector<8xf32> to vector<8x1xf32>
    %71 = vector.extract_strided_slice %13 {offsets = [0, 7], sizes = [8, 1], strides = [1, 1]} : vector<8x8xi32> to vector<8x1xi32>
    %72 = vector.broadcast %71 : vector<8x1xi32> to vector<8x16xi32>
    %73 = arith.cmpi eq, %14, %72 : vector<8x16xi32>
    %74 = arith.extui %73 : vector<8x16xi1> to vector<8x16xi32>
    %75 = arith.sitofp %74 : vector<8x16xi32> to vector<8x16xf32>
    %76 = arith.mulf %75, %12 : vector<8x16xf32>
    %cst_25 = arith.constant dense<0.000000e+00> : vector<8xf32>
    %77 = vector.multi_reduction <add>, %76, %cst_25 [1] : vector<8x16xf32> to vector<8xf32>
    %78 = vector.shape_cast %77 : vector<8xf32> to vector<8x1xf32>
    %79 = tpu.concatenate %22, %30, %38, %46, %54, %62, %70, %78 in 1 : vector<8x1xf32>, vector<8x1xf32>, vector<8x1xf32>, vector<8x1xf32>, vector<8x1xf32>, vector<8x1xf32>, vector<8x1xf32>, vector<8x1xf32> -> vector<8x8xf32>
    %c16_i32 = arith.constant 16 : i32
    %80 = vector.broadcast %c16_i32 : i32 to vector<8x8xi32>
    %81 = arith.cmpi eq, %13, %80 : vector<8x8xi32>
    %cst_26 = arith.constant -1.000000e+20 : f32
    %82 = vector.broadcast %cst_26 : f32 to vector<8x8xf32>
    %83 = arith.select %81, %82, %79 : vector<8x8xi1>, vector<8x8xf32>
    %cst_27 = arith.constant dense<0xFF800000> : vector<8xf32>
    %84 = vector.multi_reduction <maximumf>, %83, %cst_27 [1] : vector<8x8xf32> to vector<8xf32>
    %85 = vector.shape_cast %84 : vector<8xf32> to vector<8x1xf32>
    %86 = vector.broadcast %85 : vector<8x1xf32> to vector<8x8xf32>
    %87 = arith.subf %83, %86 : vector<8x8xf32>
    %88 = math.exp %87 : vector<8x8xf32>
    %cst_28 = arith.constant dense<0.000000e+00> : vector<8xf32>
    %89 = vector.multi_reduction <add>, %88, %cst_28 [1] : vector<8x8xf32> to vector<8xf32>
    %90 = vector.shape_cast %89 : vector<8xf32> to vector<8x1xf32>
    %91 = tpu.reciprocal %90 : vector<8x1xf32> -> vector<8x1xf32>
    %92 = vector.broadcast %91 : vector<8x1xf32> to vector<8x8xf32>
    %93 = arith.mulf %88, %92 : vector<8x8xf32>
    %94 = vector.extract_strided_slice %93 {offsets = [0, 0], sizes = [8, 1], strides = [1, 1]} : vector<8x8xf32> to vector<8x1xf32>
    %95 = vector.broadcast %94 : vector<8x1xf32> to vector<8x16xf32>
    %96 = arith.mulf %19, %95 : vector<8x16xf32>
    %97 = vector.extract_strided_slice %93 {offsets = [0, 1], sizes = [8, 1], strides = [1, 1]} : vector<8x8xf32> to vector<8x1xf32>
    %98 = vector.broadcast %97 : vector<8x1xf32> to vector<8x16xf32>
    %99 = arith.mulf %27, %98 : vector<8x16xf32>
    %100 = vector.extract_strided_slice %93 {offsets = [0, 2], sizes = [8, 1], strides = [1, 1]} : vector<8x8xf32> to vector<8x1xf32>
    %101 = vector.broadcast %100 : vector<8x1xf32> to vector<8x16xf32>
    %102 = arith.mulf %35, %101 : vector<8x16xf32>
    %103 = vector.extract_strided_slice %93 {offsets = [0, 3], sizes = [8, 1], strides = [1, 1]} : vector<8x8xf32> to vector<8x1xf32>
    %104 = vector.broadcast %103 : vector<8x1xf32> to vector<8x16xf32>
    %105 = arith.mulf %43, %104 : vector<8x16xf32>
    %106 = vector.extract_strided_slice %93 {offsets = [0, 4], sizes = [8, 1], strides = [1, 1]} : vector<8x8xf32> to vector<8x1xf32>
    %107 = vector.broadcast %106 : vector<8x1xf32> to vector<8x16xf32>
    %108 = arith.mulf %51, %107 : vector<8x16xf32>
    %109 = vector.extract_strided_slice %93 {offsets = [0, 5], sizes = [8, 1], strides = [1, 1]} : vector<8x8xf32> to vector<8x1xf32>
    %110 = vector.broadcast %109 : vector<8x1xf32> to vector<8x16xf32>
    %111 = arith.mulf %59, %110 : vector<8x16xf32>
    %112 = vector.extract_strided_slice %93 {offsets = [0, 6], sizes = [8, 1], strides = [1, 1]} : vector<8x8xf32> to vector<8x1xf32>
    %113 = vector.broadcast %112 : vector<8x1xf32> to vector<8x16xf32>
    %114 = arith.mulf %67, %113 : vector<8x16xf32>
    %115 = vector.extract_strided_slice %93 {offsets = [0, 7], sizes = [8, 1], strides = [1, 1]} : vector<8x8xf32> to vector<8x1xf32>
    %116 = vector.broadcast %115 : vector<8x1xf32> to vector<8x16xf32>
    %117 = arith.mulf %75, %116 : vector<8x16xf32>
    %118 = arith.addf %96, %99 : vector<8x16xf32>
    %119 = arith.addf %102, %105 : vector<8x16xf32>
    %120 = arith.addf %108, %111 : vector<8x16xf32>
    %121 = arith.addf %114, %117 : vector<8x16xf32>
    %122 = arith.addf %118, %119 : vector<8x16xf32>
    %123 = arith.addf %120, %121 : vector<8x16xf32>
    %124 = arith.addf %122, %123 : vector<8x16xf32>
    %cst_29 = arith.constant dense<0.000000e+00> : vector<8x8xf32>
    %125 = tpu.matmul %124, %11, %cst_29 {dimension_numbers = #tpu.dot_dimension_numbers<[1], [0], [0], [1], [0, 0, 1, 1], [], []>} : vector<8x16xf32>, vector<16x8xf32>, vector<8x8xf32> -> vector<8x8xf32>
    %c1_30 = arith.constant 1 : index
    %c0_31 = arith.constant 0 : index
    %c0_32 = arith.constant 0 : index
    %126 = vector.load %arg6[%c1_30, %c0_31, %c0_32] : memref<2x8x8xf32, #tpu.memory_space<vmem>>, vector<1x8x8xf32>
    %127 = vector.shape_cast %126 : vector<1x8x8xf32> to vector<8x8xf32>
    %cst_33 = arith.constant dense<0.000000e+00> : vector<8x8xf32>
    %128 = tpu.matmul %125, %127, %cst_33 {dimension_numbers = #tpu.dot_dimension_numbers<[1], [0], [0], [1], [0, 0, 1, 1], [], []>} : vector<8x8xf32>, vector<8x8xf32>, vector<8x8xf32> -> vector<8x8xf32>
    %c0_34 = arith.constant 0 : index
    %c0_35 = arith.constant 0 : index
    %129 = vector.load %arg7[%c0_34, %c0_35] : memref<3x8xf32, #tpu.memory_space<vmem>>, vector<1x8xf32>
    %130 = vector.broadcast %129 : vector<1x8xf32> to vector<8x8xf32>
    %131 = arith.addf %128, %130 : vector<8x8xf32>
    %132 = vector.extract_strided_slice %0 {offsets = [0, 0], sizes = [8, 8], strides = [1, 1]} : vector<8x32xf32> to vector<8x8xf32>
    %133 = arith.addf %131, %132 : vector<8x8xf32>
    %cst_36 = arith.constant dense<0.000000e+00> : vector<8xf32>
    %134 = vector.multi_reduction <add>, %133, %cst_36 [1] : vector<8x8xf32> to vector<8xf32>
    %135 = vector.shape_cast %134 : vector<8xf32> to vector<8x1xf32>
    %cst_37 = arith.constant 8.000000e+00 : f32
    %136 = vector.broadcast %cst_37 : f32 to vector<8x1xf32>
    %137 = arith.divf %135, %136 : vector<8x1xf32>
    %138 = vector.broadcast %137 : vector<8x1xf32> to vector<8x8xf32>
    %139 = arith.subf %133, %138 : vector<8x8xf32>
    %140 = arith.mulf %139, %139 : vector<8x8xf32>
    %cst_38 = arith.constant dense<0.000000e+00> : vector<8xf32>
    %141 = vector.multi_reduction <add>, %140, %cst_38 [1] : vector<8x8xf32> to vector<8xf32>
    %142 = vector.shape_cast %141 : vector<8xf32> to vector<8x1xf32>
    %cst_39 = arith.constant 8.000000e+00 : f32
    %143 = vector.broadcast %cst_39 : f32 to vector<8x1xf32>
    %144 = arith.divf %142, %143 : vector<8x1xf32>
    %145 = vector.broadcast %137 : vector<8x1xf32> to vector<8x8xf32>
    %146 = arith.subf %133, %145 : vector<8x8xf32>
    %cst_40 = arith.constant 9.99999974E-6 : f32
    %147 = vector.broadcast %cst_40 : f32 to vector<8x1xf32>
    %148 = arith.addf %144, %147 : vector<8x1xf32>
    %149 = math.rsqrt %148 : vector<8x1xf32>
    %150 = vector.broadcast %149 : vector<8x1xf32> to vector<8x8xf32>
    %151 = arith.mulf %146, %150 : vector<8x8xf32>
    %c1_41 = arith.constant 1 : index
    %c0_42 = arith.constant 0 : index
    %152 = vector.load %arg7[%c1_41, %c0_42] : memref<3x8xf32, #tpu.memory_space<vmem>>, vector<1x8xf32>
    %153 = vector.broadcast %152 : vector<1x8xf32> to vector<8x8xf32>
    %154 = arith.mulf %151, %153 : vector<8x8xf32>
    %c2 = arith.constant 2 : index
    %c0_43 = arith.constant 0 : index
    %155 = vector.load %arg7[%c2, %c0_43] : memref<3x8xf32, #tpu.memory_space<vmem>>, vector<1x8xf32>
    %156 = vector.broadcast %155 : vector<1x8xf32> to vector<8x8xf32>
    %157 = arith.addf %154, %156 : vector<8x8xf32>
    %cst_44 = arith.constant 0.000000e+00 : f32
    %158 = vector.broadcast %cst_44 : f32 to vector<8x112xf32>
    %159 = tpu.concatenate %157, %93, %158 in 1 : vector<8x8xf32>, vector<8x8xf32>, vector<8x112xf32> -> vector<8x128xf32>
    %c0_45 = arith.constant 0 : index
    %c0_46 = arith.constant 0 : index
    %160 = vector.load %arg8[%c0_45, %c0_46] : memref<8x128xf32, #tpu.memory_space<vmem>>, vector<8x128xf32>
    tpu.vector_store %arg8[%c0_45, %c0_46], %159 {strides = array<i32>} : memref<8x128xf32, #tpu.memory_space<vmem>>, vector<8x128xf32>,
    return
  }
  func.func @transform_0(%arg0: i32) -> (i32, i32) {
    %c0_i32 = arith.constant 0 : i32
    %c0_i32_0 = arith.constant 0 : i32
    return %arg0, %c0_i32 : i32, i32
  }
  func.func @transform_1(%arg0: i32) -> (i32, i32) {
    %c0_i32 = arith.constant 0 : i32
    %c0_i32_0 = arith.constant 0 : i32
    return %arg0, %c0_i32 : i32, i32
  }
  func.func @transform_2(%arg0: i32) -> (i32, i32) {
    %c0_i32 = arith.constant 0 : i32
    %c0_i32_0 = arith.constant 0 : i32
    return %arg0, %c0_i32 : i32, i32
  }
  func.func @transform_3(%arg0: i32) -> (i32, i32) {
    %c0_i32 = arith.constant 0 : i32
    %c0_i32_0 = arith.constant 0 : i32
    return %arg0, %c0_i32 : i32, i32
  }
  func.func @transform_4(%arg0: i32) -> (i32, i32, i32) {
    %c0_i32 = arith.constant 0 : i32
    %c0_i32_0 = arith.constant 0 : i32
    %c0_i32_1 = arith.constant 0 : i32
    %c0_i32_2 = arith.constant 0 : i32
    return %c0_i32, %c0_i32_0, %c0_i32_1 : i32, i32, i32
  }
  func.func @transform_5(%arg0: i32) -> (i32, i32, i32) {
    %c0_i32 = arith.constant 0 : i32
    %c0_i32_0 = arith.constant 0 : i32
    %c0_i32_1 = arith.constant 0 : i32
    %c0_i32_2 = arith.constant 0 : i32
    return %c0_i32, %c0_i32_0, %c0_i32_1 : i32, i32, i32
  }
  func.func @transform_6(%arg0: i32) -> (i32, i32) {
    %c0_i32 = arith.constant 0 : i32
    %c0_i32_0 = arith.constant 0 : i32
    %c0_i32_1 = arith.constant 0 : i32
    return %c0_i32, %c0_i32_0 : i32, i32
  }
  func.func @transform_7(%arg0: i32) -> (i32, i32) {
    %c0_i32 = arith.constant 0 : i32
    %c0_i32_0 = arith.constant 0 : i32
    return %arg0, %c0_i32 : i32, i32
  }
}

</mosaic_0001>

<llo_original>
// kernel: tpu_custom_call.1
$region0: #{tpu_custom_call.1}
  #allocation0 [shape = 'u32[]', space=smem, size = 0x4, offset = 0x4, fixed_abs, tag = 'smem constant byte address 0x4 - core index']
  #allocation1 [shape = 'u32[144,128]{1,0:T(1,128)}', space=vmem, size = 0x12000, scoped, tag = 'internal scratch']
  %s0 = inlined_call_operand.vmem [shape: f32[16,32], index: 0, kind: input, shape index: {}]
  %s1 = inlined_call_operand.vmem [shape: f32[64,16], index: 1, kind: input, shape index: {}]
  %s2 = inlined_call_operand.vmem [shape: f32[32,8], index: 2, kind: input, shape index: {}]
  %s3 = inlined_call_operand.vmem [shape: s32[16,8], index: 3, kind: input, shape index: {}]
  %s4 = inlined_call_operand.vmem [shape: f32[2,32,32], index: 4, kind: input, shape index: {}]
  %s5 = inlined_call_operand.vmem [shape: f32[2,8,8], index: 5, kind: input, shape index: {}]
  %s6 = inlined_call_operand.vmem [shape: f32[3,8], index: 6, kind: input, shape index: {}]
  %s7 = inlined_call_operand.hbm [shape: f32[16,128], index: 7, kind: output, shape index: {}]
  %s8 = sld [smem:[#allocation0]]
  $region61: #{tpu_custom_call.1} parent=0
    _
  %s10 = ssub.s32 1, %s8
  %s11 = scalar_select 0, %s10, %s8
  $region1: #{tpu_custom_call.1} parent=0
    #allocation2 [shape = 'u8[8192]{0}', space=vmem, size = 0x2000, scoped, tag = 'output window, operand 0']
    #allocation3 [shape = 's32[2]{0}', space=sflag, size = 0x8, scoped, tag = 'scoped memory for tpu_custom_call.1']
    %12 = vsyncpa [#allocation3], 0
    %s13 = scalar_lea.sflag [#allocation3], 1
    %14 = vsyncpa %s13, 0
    loop: start=0, step=1, limit=4
    $region2: #{tpu_custom_call.1} parent=1 // loop_pre_header
      _
    $region3: #{tpu_custom_call.1} parent=1 // loop_header
      %s16 = sphi 0, %s20
      %p17 = scmp.ge.s32.totalorder %s16, 4
      %s26 = sphi 0, %s28
      %s29 = sphi 0, %s26
      %s30 = sphi 0, %s29
      %s46 = sphi 0, %s30
      %s52 = sphi 0, %s54
      %s55 = sphi 0, %s52
      %s56 = sphi 0, %s55
      %s72 = sphi 0, %s56
      %s78 = sphi 0, %s80
      %s81 = sphi 0, %s78
      %s82 = sphi 0, %s81
      %s98 = sphi 0, %s82
      %s104 = sphi 0, %s106
      %s107 = sphi 0, %s104
      %s108 = sphi 0, %s107
      %s124 = sphi 0, %s108
      %s128 = sphi 0, %s128
      %s130 = sphi 0, %s128
      %s131 = sphi 0, %s130
      %s145 = sphi 0, %s131
      %s149 = sphi 0, %s149
      %s151 = sphi 0, %s149
      %s152 = sphi 0, %s151
      %s166 = sphi 0, %s152
      %s170 = sphi 0, %s170
      %s172 = sphi 0, %s170
      %s173 = sphi 0, %s172
      %s187 = sphi 0, %s173
      %s193 = sphi 0, %s195
      %s196 = sphi 0, %s193
      %s197 = sphi 0, %s196
      %s213 = sphi 0, %s197
    $region4: #{tpu_custom_call.1} parent=1 // loop_header_branch
      %19 = sbr.rel (%p17) target = $region8
    $region5: #{tpu_custom_call.1} parent=1 // loop_body
      %s21 = ssub.s32 %s16, 1
      %s22 = ssub.s32 %s16, 2
      %s23 = sadd.s32 %s16, 1
      %s24 = ssub.s32 %s16, %s23
      %p25 = scmp.eq.s32.totalorder %s24, 0
      %s27 = sadd.s32 %s26, 1
      %s28 = scalar_select %p25, %s26, %s27
      %p31 = pneg %p25
      %p32 = scmp.eq.s32.totalorder %s16, 1
      %p33 = por %p31, %p32
      %p34 = scmp.ne.s32.totalorder %s26, %s29
      %p35 = scmp.eq.s32.totalorder %s16, 0
      %p36 = por %p34, %p35
      %p37 = scmp.ne.s32.totalorder %s26, %s29
      %p38 = scmp.eq.s32.totalorder %s21, 1
      %p39 = por %p37, %p38
      %p40 = scmp.ne.s32.totalorder %s29, %s30
      %p41 = scmp.eq.s32.totalorder %s21, 0
      %p42 = por %p40, %p41
      %p43 = scmp.ne.s32.totalorder %s29, %s30
      %p44 = scmp.eq.s32.totalorder %s22, 1
      %p45 = por %p43, %p44
      %p47 = scmp.ne.s32.totalorder %s30, %s46
      %p48 = scmp.eq.s32.totalorder %s22, 0
      %p49 = por %p47, %p48
      %s50 = ssub.s32 %s16, %s23
      %p51 = scmp.eq.s32.totalorder %s50, 0
      %s53 = sadd.s32 %s52, 1
      %s54 = scalar_select %p51, %s52, %s53
      %p57 = pneg %p51
      %p58 = scmp.eq.s32.totalorder %s16, 1
      %p59 = por %p57, %p58
      %p60 = scmp.ne.s32.totalorder %s52, %s55
      %p61 = scmp.eq.s32.totalorder %s16, 0
      %p62 = por %p60, %p61
      %p63 = scmp.ne.s32.totalorder %s52, %s55
      %p64 = scmp.eq.s32.totalorder %s21, 1
      %p65 = por %p63, %p64
      %p66 = scmp.ne.s32.totalorder %s55, %s56
      %p67 = scmp.eq.s32.totalorder %s21, 0
      %p68 = por %p66, %p67
      %p69 = scmp.ne.s32.totalorder %s55, %s56
      %p70 = scmp.eq.s32.totalorder %s22, 1
      %p71 = por %p69, %p70
      %p73 = scmp.ne.s32.totalorder %s56, %s72
      %p74 = scmp.eq.s32.totalorder %s22, 0
      %p75 = por %p73, %p74
      %s76 = ssub.s32 %s16, %s23
      %p77 = scmp.eq.s32.totalorder %s76, 0
      %s79 = sadd.s32 %s78, 1
      %s80 = scalar_select %p77, %s78, %s79
      %p83 = pneg %p77
      %p84 = scmp.eq.s32.totalorder %s16, 1
      %p85 = por %p83, %p84
      %p86 = scmp.ne.s32.totalorder %s78, %s81
      %p87 = scmp.eq.s32.totalorder %s16, 0
      %p88 = por %p86, %p87
      %p89 = scmp.ne.s32.totalorder %s78, %s81
      %p90 = scmp.eq.s32.totalorder %s21, 1
      %p91 = por %p89, %p90
      %p92 = scmp.ne.s32.totalorder %s81, %s82
      %p93 = scmp.eq.s32.totalorder %s21, 0
      %p94 = por %p92, %p93
      %p95 = scmp.ne.s32.totalorder %s81, %s82
      %p96 = scmp.eq.s32.totalorder %s22, 1
      %p97 = por %p95, %p96
      %p99 = scmp.ne.s32.totalorder %s82, %s98
      %p100 = scmp.eq.s32.totalorder %s22, 0
      %p101 = por %p99, %p100
      %s102 = ssub.s32 %s16, %s23
      %p103 = scmp.eq.s32.totalorder %s102, 0
      %s105 = sadd.s32 %s104, 1
      %s106 = scalar_select %p103, %s104, %s105
      %p109 = pneg %p103
      %p110 = scmp.eq.s32.totalorder %s16, 1
      %p111 = por %p109, %p110
      %p112 = scmp.ne.s32.totalorder %s104, %s107
      %p113 = scmp.eq.s32.totalorder %s16, 0
      %p114 = por %p112, %p113
      %p115 = scmp.ne.s32.totalorder %s104, %s107
      %p116 = scmp.eq.s32.totalorder %s21, 1
      %p117 = por %p115, %p116
      %p118 = scmp.ne.s32.totalorder %s107, %s108
      %p119 = scmp.eq.s32.totalorder %s21, 0
      %p120 = por %p118, %p119
      %p121 = scmp.ne.s32.totalorder %s107, %s108
      %p122 = scmp.eq.s32.totalorder %s22, 1
      %p123 = por %p121, %p122
      %p125 = scmp.ne.s32.totalorder %s108, %s124
      %p126 = scmp.eq.s32.totalorder %s22, 0
      %p127 = por %p125, %p126
      %s129 = sadd.s32 %s128, 1
      %p132 = scmp.eq.s32.totalorder %s16, 1
      %p133 = scmp.ne.s32.totalorder %s128, %s130
      %p134 = scmp.eq.s32.totalorder %s16, 0
      %p135 = por %p133, %p134
      %p136 = scmp.ne.s32.totalorder %s128, %s130
      %p137 = scmp.eq.s32.totalorder %s21, 1
      %p138 = por %p136, %p137
      %p139 = scmp.ne.s32.totalorder %s130, %s131
      %p140 = scmp.eq.s32.totalorder %s21, 0
      %p141 = por %p139, %p140
      %p142 = scmp.ne.s32.totalorder %s130, %s131
      %p143 = scmp.eq.s32.totalorder %s22, 1
      %p144 = por %p142, %p143
      %p146 = scmp.ne.s32.totalorder %s131, %s145
      %p147 = scmp.eq.s32.totalorder %s22, 0
      %p148 = por %p146, %p147
      %s150 = sadd.s32 %s149, 1
      %p153 = scmp.eq.s32.totalorder %s16, 1
      %p154 = scmp.ne.s32.totalorder %s149, %s151
      %p155 = scmp.eq.s32.totalorder %s16, 0
      %p156 = por %p154, %p155
      %p157 = scmp.ne.s32.totalorder %s149, %s151
      %p158 = scmp.eq.s32.totalorder %s21, 1
      %p159 = por %p157, %p158
      %p160 = scmp.ne.s32.totalorder %s151, %s152
      %p161 = scmp.eq.s32.totalorder %s21, 0
      %p162 = por %p160, %p161
      %p163 = scmp.ne.s32.totalorder %s151, %s152
      %p164 = scmp.eq.s32.totalorder %s22, 1
      %p165 = por %p163, %p164
      %p167 = scmp.ne.s32.totalorder %s152, %s166
      %p168 = scmp.eq.s32.totalorder %s22, 0
      %p169 = por %p167, %p168
      %s171 = sadd.s32 %s170, 1
      %p174 = scmp.eq.s32.totalorder %s16, 1
      %p175 = scmp.ne.s32.totalorder %s170, %s172
      %p176 = scmp.eq.s32.totalorder %s16, 0
      %p177 = por %p175, %p176
      %p178 = scmp.ne.s32.totalorder %s170, %s172
      %p179 = scmp.eq.s32.totalorder %s21, 1
      %p180 = por %p178, %p179
      %p181 = scmp.ne.s32.totalorder %s172, %s173
      %p182 = scmp.eq.s32.totalorder %s21, 0
      %p183 = por %p181, %p182
      %p184 = scmp.ne.s32.totalorder %s172, %s173
      %p185 = scmp.eq.s32.totalorder %s22, 1
      %p186 = por %p184, %p185
      %p188 = scmp.ne.s32.totalorder %s173, %s187
      %p189 = scmp.eq.s32.totalorder %s22, 0
      %p190 = por %p188, %p189
      %s191 = ssub.s32 %s16, %s23
      %p192 = scmp.eq.s32.totalorder %s191, 0
      %s194 = sadd.s32 %s193, 1
      %s195 = scalar_select %p192, %s193, %s194
      %p198 = pneg %p192
      %p199 = scmp.eq.s32.totalorder %s16, 1
      %p200 = por %p198, %p199
      %p201 = scmp.ne.s32.totalorder %s193, %s196
      %p202 = scmp.eq.s32.totalorder %s16, 0
      %p203 = por %p201, %p202
      %p204 = scmp.ne.s32.totalorder %s193, %s196
      %p205 = scmp.eq.s32.totalorder %s21, 1
      %p206 = por %p204, %p205
      %p207 = scmp.ne.s32.totalorder %s196, %s197
      %p208 = scmp.eq.s32.totalorder %s21, 0
      %p209 = por %p207, %p208
      %p210 = scmp.ne.s32.totalorder %s196, %s197
      %p211 = scmp.eq.s32.totalorder %s22, 1
      %p212 = por %p210, %p211
      %p214 = scmp.ne.s32.totalorder %s197, %s213
      %p215 = scmp.eq.s32.totalorder %s22, 0
      %p216 = por %p214, %p215
      %p217 = scmp.le.s32.totalorder 1, %s16
      %p218 = scmp.lt.s32.totalorder %s16, 3
      %p219 = pnand %p217, %p218
      %p220 = pneg %p219
      // Predicated region
      $region9: #{tpu_custom_call.1} parent=5 // pred_check
        _
      $region10: #{tpu_custom_call.1} parent=5 // pred_check_branch
        %222 = sbr.rel (%p219) target = $region12
      $region11: #{tpu_custom_call.1} parent=5 // pred_region
        %s223 = ssub.s32 %s16, 1
        // Predicated region
        $region13: #{tpu_custom_call.1} parent=11 // pred_check
          %p224 = pneg %p141
        $region14: #{tpu_custom_call.1} parent=11 // pred_check_branch
          %226 = sbr.rel (%p224) target = $region16
        $region15: #{tpu_custom_call.1} parent=11 // pred_region
          _
        $region16: #{tpu_custom_call.1} parent=11 // pred_fallthru
          _
        // Predicated region
        $region17: #{tpu_custom_call.1} parent=11 // pred_check
          %p227 = pneg %p162
        $region18: #{tpu_custom_call.1} parent=11 // pred_check_branch
          %229 = sbr.rel (%p227) target = $region20
        $region19: #{tpu_custom_call.1} parent=11 // pred_region
          _
        $region20: #{tpu_custom_call.1} parent=11 // pred_fallthru
          _
        // Predicated region
        $region21: #{tpu_custom_call.1} parent=11 // pred_check
          %p230 = pneg %p183
        $region22: #{tpu_custom_call.1} parent=11 // pred_check_branch
          %232 = sbr.rel (%p230) target = $region24
        $region23: #{tpu_custom_call.1} parent=11 // pred_region
          _
        $region24: #{tpu_custom_call.1} parent=11 // pred_fallthru
          _
      $region12: #{tpu_custom_call.1} parent=5 // pred_fallthru
        _
      %p233 = scmp.lt.s32.totalorder %s16, 2
      // Predicated region
      $region25: #{tpu_custom_call.1} parent=5 // pred_check
        %p234 = pneg %p233
      $region26: #{tpu_custom_call.1} parent=5 // pred_check_branch
        %236 = sbr.rel (%p234) target = $region28
      $region27: #{tpu_custom_call.1} parent=5 // pred_region
        // Predicated region
        $region29: #{tpu_custom_call.1} parent=27 // pred_check
          %p237 = pneg %p36
        $region30: #{tpu_custom_call.1} parent=27 // pred_check_branch
          %239 = sbr.rel (%p237) target = $region32
        $region31: #{tpu_custom_call.1} parent=27 // pred_region
          %p240 = scmp.lt.s32.totalorder %s16, 1
          %s241 = scalar_select %p240, %s16, 1
          %s242 = smul.addr %s241, 8
          %s243 = scalar_lea.vmem %s0, %s242
        $region32: #{tpu_custom_call.1} parent=27 // pred_fallthru
          _
        // Predicated region
        $region33: #{tpu_custom_call.1} parent=27 // pred_check
          %p244 = pneg %p62
        $region34: #{tpu_custom_call.1} parent=27 // pred_check_branch
          %246 = sbr.rel (%p244) target = $region36
        $region35: #{tpu_custom_call.1} parent=27 // pred_region
          %s247 = smul.u32 4, %s16
          %p248 = scmp.lt.s32.totalorder %s247, 7
          %s249 = scalar_select %p248, %s247, 7
          %s250 = smul.addr %s249, 8
          %s251 = scalar_lea.vmem %s1, %s250
          %s252 = smul.u32 4, %s16
        $region36: #{tpu_custom_call.1} parent=27 // pred_fallthru
          _
        // Predicated region
        $region37: #{tpu_custom_call.1} parent=27 // pred_check
          %p253 = pneg %p88
        $region38: #{tpu_custom_call.1} parent=27 // pred_check_branch
          %255 = sbr.rel (%p253) target = $region40
        $region39: #{tpu_custom_call.1} parent=27 // pred_region
          %s256 = smul.u32 2, %s16
          %p257 = scmp.lt.s32.totalorder %s256, 3
          %s258 = scalar_select %p257, %s256, 3
          %s259 = smul.addr %s258, 8
          %s260 = scalar_lea.vmem %s2, %s259
          %s261 = smul.u32 2, %s16
        $region40: #{tpu_custom_call.1} parent=27 // pred_fallthru
          _
        // Predicated region
        $region41: #{tpu_custom_call.1} parent=27 // pred_check
          %p262 = pneg %p114
        $region42: #{tpu_custom_call.1} parent=27 // pred_check_branch
          %264 = sbr.rel (%p262) target = $region44
        $region43: #{tpu_custom_call.1} parent=27 // pred_region
          %p265 = scmp.lt.s32.totalorder %s16, 1
          %s266 = scalar_select %p265, %s16, 1
          %s267 = smul.addr %s266, 8
          %s268 = scalar_lea.vmem %s3, %s267
        $region44: #{tpu_custom_call.1} parent=27 // pred_fallthru
          _
      $region28: #{tpu_custom_call.1} parent=5 // pred_fallthru
        _
      %p269 = scmp.le.s32.totalorder 1, %s16
      %p270 = scmp.lt.s32.totalorder %s16, 3
      %p271 = pnand %p269, %p270
      %p272 = pneg %p271
      // Predicated region
      $region45: #{tpu_custom_call.1} parent=5 // pred_check
        _
      $region46: #{tpu_custom_call.1} parent=5 // pred_check_branch
        %274 = sbr.rel (%p271) target = $region48
      $region47: #{tpu_custom_call.1} parent=5 // pred_region
        %s275 = ssub.s32 %s16, 1
        %p276 = scmp.lt.s32.totalorder %s21, 1
        %s277 = scalar_select %p276, %s21, 1
        %s278 = smul.addr %s277, 8
        %s279 = scalar_lea.vmem %s0, %s278
        %p280 = pneg %p42
        %p281 = pneg %p39
        %s282 = smul.u32 4, %s21
        %p283 = scmp.lt.s32.totalorder %s282, 7
        %s284 = scalar_select %p283, %s282, 7
        %s285 = smul.addr %s284, 8
        %s286 = scalar_lea.vmem %s1, %s285
        %p287 = pneg %p68
        %p288 = pneg %p65
        %s289 = smul.u32 2, %s21
        %p290 = scmp.lt.s32.totalorder %s289, 3
        %s291 = scalar_select %p290, %s289, 3
        %s292 = smul.addr %s291, 8
        %s293 = scalar_lea.vmem %s2, %s292
        %p294 = pneg %p94
        %p295 = pneg %p91
        %p296 = scmp.lt.s32.totalorder %s21, 1
        %s297 = scalar_select %p296, %s21, 1
        %s298 = smul.addr %s297, 8
        %s299 = scalar_lea.vmem %s3, %s298
        %p300 = pneg %p120
        %p301 = pneg %p117
        %p302 = pneg %p141
        %p303 = pneg %p138
        %p304 = pneg %p162
        %p305 = pneg %p159
        %p306 = pneg %p183
        %p307 = pneg %p180
        %p308 = pneg %p209
        %p309 = pneg %p206
        %s310 = sand.u32 %s196, 1
        %s311 = scalar_lea.sflag [#allocation3], %s310
        %s312 = sand.u32 %s196, 1
        %s313 = smul.addr %s312, 8
        %s314 = scalar_lea.vmem [#allocation2], %s313
        %p315 = scmp.lt.s32.totalorder %s21, 1
        %s316 = scalar_select %p315, %s21, 1
        %s317 = smul.addr %s316, 8
        %s318 = scalar_lea.vmem %s0, %s317
        %s319 = smul.u32 4, %s21
        %p320 = scmp.lt.s32.totalorder %s319, 7
        %s321 = scalar_select %p320, %s319, 7
        %s322 = smul.addr %s321, 8
        %s323 = scalar_lea.vmem %s1, %s322
        %s324 = smul.u32 4, %s21
        %s325 = smul.u32 2, %s21
        %p326 = scmp.lt.s32.totalorder %s325, 3
        %s327 = scalar_select %p326, %s325, 3
        %s328 = smul.addr %s327, 8
        %s329 = scalar_lea.vmem %s2, %s328
        %s330 = smul.u32 2, %s21
        %p331 = scmp.lt.s32.totalorder %s21, 1
        %s332 = scalar_select %p331, %s21, 1
        %s333 = smul.addr %s332, 8
        %s334 = scalar_lea.vmem %s3, %s333
        %v335 = vld [vmem:[%s318] sm:$0xff]
        %v336 = vld [vmem:[%s4] sm:$0xff]
        %v337 = vld [vmem:[%s4 + $0x8] sm:$0xff]
        %v338 = vld [vmem:[%s4 + $0x10] sm:$0xff]
        %v339 = vld [vmem:[%s4 + $0x18] sm:$0xff]
        %vm340 = vcmask 261120
        %v342 = vsel %vm340, %v335, 0
        %344 = vmatprep.subr.mxu0 0.0
        %345 = vmatpush1.msra.mxu0 0.0
        %346 = vmatprep.subr.mxu0 0.0
        %347 = vmatpush1.msra.mxu0 0.0
        %348 = vmatprep.subr.mxu0 0.0
        %349 = vmatpush1.msra.mxu0 0.0
        %350 = vmatprep.subr.mxu0 0.0
        %351 = vmatpush1.msra.mxu0 0.0
        %352 = vmatprep.subr.mxu0 0.0
        %353 = vmatpush1.msra.mxu0 0.0
        %354 = vmatprep.subr.mxu0 0.0
        %355 = vmatpush1.msra.mxu0 0.0
        %356 = vmatprep.subr.mxu0 0.0
        %357 = vmatpush1.msra.mxu0 0.0
        %358 = vmatprep.subr.mxu0 0.0
        %359 = vmatpush1.msra.mxu0 0.0
        %360 = vmatprep.subr.mxu0 0.0
        %361 = vmatpush1.msra.mxu0 0.0
        %362 = vmatprep.subr.mxu0 0.0
        %363 = vmatpush1.msra.mxu0 0.0
        %364 = vmatprep.subr.mxu0 0.0
        %365 = vmatpush1.msra.mxu0 0.0
        %366 = vmatprep.subr.mxu0 0.0
        %367 = vmatpush1.msra.mxu0 0.0
        %368 = vmatprep.subr.mxu0 0.0
        %369 = vmatpush1.msra.mxu0 %v339
        %370 = vmatprep.subr.mxu0 0.0
        %371 = vmatpush1.msra.mxu0 %v338
        %372 = vmatprep.subr.mxu0 0.0
        %373 = vmatpush1.msra.mxu0 %v337
        %374 = vmatprep.subr.mxu0 0.0
        %375 = vmatpush1.msra.mxu0 %v336
        %376 = vmatprep.subr.mxu0 0.0
        %377 = vmatpush2.msra.mxu0 0.0
        %378 = vmatprep.subr.mxu0 0.0
        %379 = vmatpush2.msra.mxu0 0.0
        %380 = vmatprep.subr.mxu0 0.0
        %381 = vmatpush2.msra.mxu0 0.0
        %382 = vmatprep.subr.mxu0 0.0
        %383 = vmatpush2.msra.mxu0 0.0
        %384 = vmatprep.subr.mxu0 0.0
        %385 = vmatpush2.msra.mxu0 0.0
        %386 = vmatprep.subr.mxu0 0.0
        %387 = vmatpush2.msra.mxu0 0.0
        %388 = vmatprep.subr.mxu0 0.0
        %389 = vmatpush2.msra.mxu0 0.0
        %390 = vmatprep.subr.mxu0 0.0
        %391 = vmatpush2.msra.mxu0 0.0
        %392 = vmatprep.subr.mxu0 0.0
        %393 = vmatpush2.msra.mxu0 0.0
        %394 = vmatprep.subr.mxu0 0.0
        %395 = vmatpush2.msra.mxu0 0.0
        %396 = vmatprep.subr.mxu0 0.0
        %397 = vmatpush2.msra.mxu0 0.0
        %398 = vmatprep.subr.mxu0 0.0
        %399 = vmatpush2.msra.mxu0 0.0
        %400 = vmatprep.subr.mxu0 0.0
        %401 = vmatpush2.msra.mxu0 0.0
        %402 = vmatprep.subr.mxu0 0.0
        %403 = vmatpush2.msra.mxu0 0.0
        %404 = vmatprep.subr.mxu0 0.0
        %405 = vmatpush2.msra.mxu0 0.0
        %406 = vmatprep.subr.mxu0 0.0
        %407 = vmatpush2.msra.mxu0 0.0
        %408 = vmatprep.mubr.f32.mxu0 0.0
        %409 = vmatmul.mubr.f32.gmra.mxu0 %v342
        %v410 = vpop.f32.mrf.mxu0
        %v411 = vadd.f32 0.0, %v410
        %v412 = vpop.f32.mrf.mxu0
        %413 = vdwg.mxu0
        %s414 = scalar_lea.vmem %s4, 32
        %v415 = vld [vmem:[%s414] sm:$0xff]
        %v416 = vld [vmem:[%s414 + $0x8] sm:$0xff]
        %v417 = vld [vmem:[%s414 + $0x10] sm:$0xff]
        %v418 = vld [vmem:[%s414 + $0x18] sm:$0xff]
        %v419 = vld [vmem:[%s323] sm:$0xff]
        %v420 = vld [vmem:[%s323 + $0x8] sm:$0xff]
        %v421 = vld [vmem:[%s323 + $0x10] sm:$0xff]
        %v422 = vld [vmem:[%s323 + $0x18] sm:$0xff]
        %v424 = vsel %vm340, %v415, 0
        %v427 = vsel %vm340, %v416, 0
        %v430 = vsel %vm340, %v417, 0
        %v433 = vsel %vm340, %v418, 0
        %435 = vmatprep.subr.mxu0 0.0
        %436 = vmatpush1.msra.mxu0 0.0
        %437 = vmatprep.subr.mxu0 0.0
        %438 = vmatpush1.msra.mxu0 0.0
        %439 = vmatprep.subr.mxu0 0.0
        %440 = vmatpush1.msra.mxu0 0.0
        %441 = vmatprep.subr.mxu0 0.0
        %442 = vmatpush1.msra.mxu0 0.0
        %443 = vmatprep.subr.mxu0 0.0
        %444 = vmatpush1.msra.mxu0 0.0
        %445 = vmatprep.subr.mxu0 0.0
        %446 = vmatpush1.msra.mxu0 0.0
        %447 = vmatprep.subr.mxu0 0.0
        %448 = vmatpush1.msra.mxu0 0.0
        %449 = vmatprep.subr.mxu0 0.0
        %450 = vmatpush1.msra.mxu0 0.0
        %451 = vmatprep.subr.mxu0 0.0
        %452 = vmatpush1.msra.mxu0 0.0
        %453 = vmatprep.subr.mxu0 0.0
        %454 = vmatpush1.msra.mxu0 0.0
        %455 = vmatprep.subr.mxu0 0.0
        %456 = vmatpush1.msra.mxu0 0.0
        %457 = vmatprep.subr.mxu0 0.0
        %458 = vmatpush1.msra.mxu0 0.0
        %459 = vmatprep.subr.mxu0 0.0
        %460 = vmatpush1.msra.mxu0 %v422
        %461 = vmatprep.subr.mxu0 0.0
        %462 = vmatpush1.msra.mxu0 %v421
        %463 = vmatprep.subr.mxu0 0.0
        %464 = vmatpush1.msra.mxu0 %v420
        %465 = vmatprep.subr.mxu0 0.0
        %466 = vmatpush1.msra.mxu0 %v419
        %467 = vmatprep.subr.mxu0 0.0
        %468 = vmatpush2.msra.mxu0 0.0
        %469 = vmatprep.subr.mxu0 0.0
        %470 = vmatpush2.msra.mxu0 0.0
        %471 = vmatprep.subr.mxu0 0.0
        %472 = vmatpush2.msra.mxu0 0.0
        %473 = vmatprep.subr.mxu0 0.0
        %474 = vmatpush2.msra.mxu0 0.0
        %475 = vmatprep.subr.mxu0 0.0
        %476 = vmatpush2.msra.mxu0 0.0
        %477 = vmatprep.subr.mxu0 0.0
        %478 = vmatpush2.msra.mxu0 0.0
        %479 = vmatprep.subr.mxu0 0.0
        %480 = vmatpush2.msra.mxu0 0.0
        %481 = vmatprep.subr.mxu0 0.0
        %482 = vmatpush2.msra.mxu0 0.0
        %483 = vmatprep.subr.mxu0 0.0
        %484 = vmatpush2.msra.mxu0 0.0
        %485 = vmatprep.subr.mxu0 0.0
        %486 = vmatpush2.msra.mxu0 0.0
        %487 = vmatprep.subr.mxu0 0.0
        %488 = vmatpush2.msra.mxu0 0.0
        %489 = vmatprep.subr.mxu0 0.0
        %490 = vmatpush2.msra.mxu0 0.0
        %491 = vmatprep.subr.mxu0 0.0
        %492 = vmatpush2.msra.mxu0 0.0
        %493 = vmatprep.subr.mxu0 0.0
        %494 = vmatpush2.msra.mxu0 0.0
        %495 = vmatprep.subr.mxu0 0.0
        %496 = vmatpush2.msra.mxu0 0.0
        %497 = vmatprep.subr.mxu0 0.0
        %498 = vmatpush2.msra.mxu0 0.0
        %499 = vmatprep.mubr.f32.mxu0 0.0
        %500 = vmatmul.mubr.f32.gmra.mxu0 %v424
        %v501 = vpop.f32.mrf.mxu0
        %v502 = vadd.f32 0.0, %v501
        %v503 = vpop.f32.mrf.mxu0
        %504 = vmatprep.mubr.f32.mxu0 0.0
        %505 = vmatmul.mubr.f32.gmra.mxu0 %v427
        %v506 = vpop.f32.mrf.mxu0
        %v507 = vadd.f32 0.0, %v506
        %v508 = vpop.f32.mrf.mxu0
        %509 = vmatprep.mubr.f32.mxu0 0.0
        %510 = vmatmul.mubr.f32.gmra.mxu0 %v430
        %v511 = vpop.f32.mrf.mxu0
        %v512 = vadd.f32 0.0, %v511
        %v513 = vpop.f32.mrf.mxu0
        %514 = vmatprep.mubr.f32.mxu0 0.0
        %515 = vmatmul.mubr.f32.gmra.mxu0 %v433
        %v516 = vpop.f32.mrf.mxu0
        %v517 = vadd.f32 0.0, %v516
        %v518 = vpop.f32.mrf.mxu0
        %519 = vdwg.mxu0
        %v520 = vld [vmem:[%s329] sm:$0xff]
        %v521 = vld [vmem:[%s329 + $0x8] sm:$0xff]
        %v522 = vld [vmem:[%s5] sm:$0xff]
        %vm523 = vcmask 64512
        %v525 = vsel %vm523, %v520, 0
        %v528 = vsel %vm523, %v521, 0
        %530 = vmatprep.subr.mxu0 0.0
        %531 = vmatpush1.msra.mxu0 0.0
        %532 = vmatprep.subr.mxu0 0.0
        %533 = vmatpush1.msra.mxu0 0.0
        %534 = vmatprep.subr.mxu0 0.0
        %535 = vmatpush1.msra.mxu0 0.0
        %536 = vmatprep.subr.mxu0 0.0
        %537 = vmatpush1.msra.mxu0 0.0
        %538 = vmatprep.subr.mxu0 0.0
        %539 = vmatpush1.msra.mxu0 0.0
        %540 = vmatprep.subr.mxu0 0.0
        %541 = vmatpush1.msra.mxu0 0.0
        %542 = vmatprep.subr.mxu0 0.0
        %543 = vmatpush1.msra.mxu0 0.0
        %544 = vmatprep.subr.mxu0 0.0
        %545 = vmatpush1.msra.mxu0 0.0
        %546 = vmatprep.subr.mxu0 0.0
        %547 = vmatpush1.msra.mxu0 0.0
        %548 = vmatprep.subr.mxu0 0.0
        %549 = vmatpush1.msra.mxu0 0.0
        %550 = vmatprep.subr.mxu0 0.0
        %551 = vmatpush1.msra.mxu0 0.0
        %552 = vmatprep.subr.mxu0 0.0
        %553 = vmatpush1.msra.mxu0 0.0
        %554 = vmatprep.subr.mxu0 0.0
        %555 = vmatpush1.msra.mxu0 0.0
        %556 = vmatprep.subr.mxu0 0.0
        %557 = vmatpush1.msra.mxu0 0.0
        %558 = vmatprep.subr.mxu0 0.0
        %559 = vmatpush1.msra.mxu0 0.0
        %560 = vmatprep.subr.mxu0 0.0
        %561 = vmatpush1.msra.mxu0 %v522
        %562 = vmatprep.subr.mxu0 0.0
        %563 = vmatpush2.msra.mxu0 0.0
        %564 = vmatprep.subr.mxu0 0.0
        %565 = vmatpush2.msra.mxu0 0.0
        %566 = vmatprep.subr.mxu0 0.0
        %567 = vmatpush2.msra.mxu0 0.0
        %568 = vmatprep.subr.mxu0 0.0
        %569 = vmatpush2.msra.mxu0 0.0
        %570 = vmatprep.subr.mxu0 0.0
        %571 = vmatpush2.msra.mxu0 0.0
        %572 = vmatprep.subr.mxu0 0.0
        %573 = vmatpush2.msra.mxu0 0.0
        %574 = vmatprep.subr.mxu0 0.0
        %575 = vmatpush2.msra.mxu0 0.0
        %576 = vmatprep.subr.mxu0 0.0
        %577 = vmatpush2.msra.mxu0 0.0
        %578 = vmatprep.subr.mxu0 0.0
        %579 = vmatpush2.msra.mxu0 0.0
        %580 = vmatprep.subr.mxu0 0.0
        %581 = vmatpush2.msra.mxu0 0.0
        %582 = vmatprep.subr.mxu0 0.0
        %583 = vmatpush2.msra.mxu0 0.0
        %584 = vmatprep.subr.mxu0 0.0
        %585 = vmatpush2.msra.mxu0 0.0
        %586 = vmatprep.subr.mxu0 0.0
        %587 = vmatpush2.msra.mxu0 0.0
        %588 = vmatprep.subr.mxu0 0.0
        %589 = vmatpush2.msra.mxu0 0.0
        %590 = vmatprep.subr.mxu0 0.0
        %591 = vmatpush2.msra.mxu0 0.0
        %592 = vmatprep.subr.mxu0 0.0
        %593 = vmatpush2.msra.mxu0 0.0
        %594 = vmatprep.mubr.f32.mxu0 0.0
        %595 = vmatmul.mubr.f32.gmra.mxu0 %v525
        %v596 = vpop.f32.mrf.mxu0
        %v597 = vadd.f32 0.0, %v596
        %v598 = vpop.f32.mrf.mxu0
        %599 = vmatprep.mubr.f32.mxu0 0.0
        %600 = vmatmul.mubr.f32.gmra.mxu0 %v528
        %v601 = vpop.f32.mrf.mxu0
        %v602 = vadd.f32 0.0, %v601
        %v603 = vpop.f32.mrf.mxu0
        %604 = vdwg.mxu0
        %v606 = vsel %vm340, %v411, 0
        %608 = vmatprep.subr.mxu0 0.0
        %609 = vmatpush1.msra.mxu0 0.0
        %610 = vmatprep.subr.mxu0 0.0
        %611 = vmatpush1.msra.mxu0 0.0
        %612 = vmatprep.subr.mxu0 0.0
        %613 = vmatpush1.msra.mxu0 0.0
        %614 = vmatprep.subr.mxu0 0.0
        %615 = vmatpush1.msra.mxu0 0.0
        %616 = vmatprep.subr.mxu0 0.0
        %617 = vmatpush1.msra.mxu0 0.0
        %618 = vmatprep.subr.mxu0 0.0
        %619 = vmatpush1.msra.mxu0 0.0
        %620 = vmatprep.subr.mxu0 0.0
        %621 = vmatpush1.msra.mxu0 0.0
        %622 = vmatprep.subr.mxu0 0.0
        %623 = vmatpush1.msra.mxu0 0.0
        %624 = vmatprep.subr.mxu0 0.0
        %625 = vmatpush1.msra.mxu0 0.0
        %626 = vmatprep.subr.mxu0 0.0
        %627 = vmatpush1.msra.mxu0 0.0
        %628 = vmatprep.subr.mxu0 0.0
        %629 = vmatpush1.msra.mxu0 0.0
        %630 = vmatprep.subr.mxu0 0.0
        %631 = vmatpush1.msra.mxu0 0.0
        %632 = vmatprep.subr.mxu0 0.0
        %633 = vmatpush1.msra.mxu0 %v517
        %634 = vmatprep.subr.mxu0 0.0
        %635 = vmatpush1.msra.mxu0 %v512
        %636 = vmatprep.subr.mxu0 0.0
        %637 = vmatpush1.msra.mxu0 %v507
        %638 = vmatprep.subr.mxu0 0.0
        %639 = vmatpush1.msra.mxu0 %v502
        %640 = vmatprep.subr.mxu0 0.0
        %641 = vmatpush2.msra.mxu0 0.0
        %642 = vmatprep.subr.mxu0 0.0
        %643 = vmatpush2.msra.mxu0 0.0
        %644 = vmatprep.subr.mxu0 0.0
        %645 = vmatpush2.msra.mxu0 0.0
        %646 = vmatprep.subr.mxu0 0.0
        %647 = vmatpush2.msra.mxu0 0.0
        %648 = vmatprep.subr.mxu0 0.0
        %649 = vmatpush2.msra.mxu0 0.0
        %650 = vmatprep.subr.mxu0 0.0
        %651 = vmatpush2.msra.mxu0 0.0
        %652 = vmatprep.subr.mxu0 0.0
        %653 = vmatpush2.msra.mxu0 0.0
        %654 = vmatprep.subr.mxu0 0.0
        %655 = vmatpush2.msra.mxu0 0.0
        %656 = vmatprep.subr.mxu0 0.0
        %657 = vmatpush2.msra.mxu0 0.0
        %658 = vmatprep.subr.mxu0 0.0
        %659 = vmatpush2.msra.mxu0 0.0
        %660 = vmatprep.subr.mxu0 0.0
        %661 = vmatpush2.msra.mxu0 0.0
        %662 = vmatprep.subr.mxu0 0.0
        %663 = vmatpush2.msra.mxu0 0.0
        %664 = vmatprep.subr.mxu0 0.0
        %665 = vmatpush2.msra.mxu0 0.0
        %666 = vmatprep.subr.mxu0 0.0
        %667 = vmatpush2.msra.mxu0 0.0
        %668 = vmatprep.subr.mxu0 0.0
        %669 = vmatpush2.msra.mxu0 0.0
        %670 = vmatprep.subr.mxu0 0.0
        %671 = vmatpush2.msra.mxu0 0.0
        %672 = vmatprep.mubr.f32.mxu0 0.0
        %673 = vmatmul.mubr.f32.gmra.mxu0 %v606
        %v674 = vpop.f32.mrf.mxu0
        %v675 = vadd.f32 0.0, %v674
        %v676 = vpop.f32.mrf.mxu0
        %677 = vdwg.mxu0
        %v678 = vld [vmem:[%s334] sm:$0xff]
        %v679 = vlaneseq
        %v680 = vand.u32 %v679, 127
        %681 = vset.pattern.permute.xlu0 0
        %682 = vperm.xlu0 %681, %v678
        %v683 = vpop.permute.xlu0 %682
        %vm684 = vcmp.eq.s32.totalorder %v680, %v683
        %v685 = vsel %vm684, 1, 0
        %v686 = vcvt.s32.f32 %v685
        %v687 = vmul.f32 %v686, %v675
        %vm688 = vcmask 130048
        %v689 = vsel %vm688, %v687, 0.0
        %690 = vadd.xlane.f32.xlu0 %v689
        %v691 = vpop.xlane.xlu0 %690
        %692 = vset.pattern.permute.xlu0 1
        %693 = vperm.xlu0 %692, %v678
        %v694 = vpop.permute.xlu0 %693
        %vm695 = vcmp.eq.s32.totalorder %v680, %v694
        %v696 = vsel %vm695, 1, 0
        %v697 = vcvt.s32.f32 %v696
        %v698 = vmul.f32 %v697, %v675
        %v699 = vsel %vm688, %v698, 0.0
        %700 = vadd.xlane.f32.xlu0 %v699
        %v701 = vpop.xlane.xlu0 %700
        %702 = vset.pattern.permute.xlu0 2
        %703 = vperm.xlu0 %702, %v678
        %v704 = vpop.permute.xlu0 %703
        %vm705 = vcmp.eq.s32.totalorder %v680, %v704
        %v706 = vsel %vm705, 1, 0
        %v707 = vcvt.s32.f32 %v706
        %v708 = vmul.f32 %v707, %v675
        %v709 = vsel %vm688, %v708, 0.0
        %710 = vadd.xlane.f32.xlu0 %v709
        %v711 = vpop.xlane.xlu0 %710
        %712 = vset.pattern.permute.xlu0 3
        %713 = vperm.xlu0 %712, %v678
        %v714 = vpop.permute.xlu0 %713
        %vm715 = vcmp.eq.s32.totalorder %v680, %v714
        %v716 = vsel %vm715, 1, 0
        %v717 = vcvt.s32.f32 %v716
        %v718 = vmul.f32 %v717, %v675
        %v719 = vsel %vm688, %v718, 0.0
        %720 = vadd.xlane.f32.xlu0 %v719
        %v721 = vpop.xlane.xlu0 %720
        %722 = vset.pattern.permute.xlu0 4
        %723 = vperm.xlu0 %722, %v678
        %v724 = vpop.permute.xlu0 %723
        %vm725 = vcmp.eq.s32.totalorder %v680, %v724
        %v726 = vsel %vm725, 1, 0
        %v727 = vcvt.s32.f32 %v726
        %v728 = vmul.f32 %v727, %v675
        %v729 = vsel %vm688, %v728, 0.0
        %730 = vadd.xlane.f32.xlu0 %v729
        %v731 = vpop.xlane.xlu0 %730
        %732 = vset.pattern.permute.xlu0 5
        %733 = vperm.xlu0 %732, %v678
        %v734 = vpop.permute.xlu0 %733
        %vm735 = vcmp.eq.s32.totalorder %v680, %v734
        %v736 = vsel %vm735, 1, 0
        %v737 = vcvt.s32.f32 %v736
        %v738 = vmul.f32 %v737, %v675
        %v739 = vsel %vm688, %v738, 0.0
        %740 = vadd.xlane.f32.xlu0 %v739
        %v741 = vpop.xlane.xlu0 %740
        %742 = vset.pattern.permute.xlu0 6
        %743 = vperm.xlu0 %742, %v678
        %v744 = vpop.permute.xlu0 %743
        %vm745 = vcmp.eq.s32.totalorder %v680, %v744
        %v746 = vsel %vm745, 1, 0
        %v747 = vcvt.s32.f32 %v746
        %v748 = vmul.f32 %v747, %v675
        %v749 = vsel %vm688, %v748, 0.0
        %750 = vadd.xlane.f32.xlu0 %v749
        %v751 = vpop.xlane.xlu0 %750
        %752 = vset.pattern.permute.xlu0 7
        %753 = vperm.xlu0 %752, %v678
        %v754 = vpop.permute.xlu0 %753
        %vm755 = vcmp.eq.s32.totalorder %v680, %v754
        %v756 = vsel %vm755, 1, 0
        %v757 = vcvt.s32.f32 %v756
        %v758 = vmul.f32 %v757, %v675
        %v759 = vsel %vm688, %v758, 0.0
        %760 = vadd.xlane.f32.xlu0 %v759
        %v761 = vpop.xlane.xlu0 %760
        %vm762 = vcmask 7168
        %v763 = vsel %vm762, %v691, %v701
        %vm764 = vcmask 15360
        %v765 = vsel %vm764, %v763, %v711
        %vm766 = vcmask 23552
        %v767 = vsel %vm766, %v765, %v721
        %vm768 = vcmask 31744
        %v769 = vsel %vm768, %v767, %v731
        %vm770 = vcmask 39936
        %v771 = vsel %vm770, %v769, %v741
        %vm772 = vcmask 48128
        %v773 = vsel %vm772, %v771, %v751
        %vm774 = vcmask 56320
        %v775 = vsel %vm774, %v773, %v761
        %vm776 = vcmp.eq.s32.totalorder %v678, 16
        %v777 = vsel %vm776, -1e+20, %v775
        %v778 = vsel %vm523, %v777, -inf
        %779 = vmax.xlane.f32.xlu0 %v778
        %v780 = vpop.xlane.xlu0 %779
        %v781 = vsub.f32 %v777, %v780
        %v782 = vmul.f32 %v781, 1.442695
        %v783 = vpow.pop %v782
        %v784 = vsel %vm523, %v783, 0.0
        %785 = vadd.xlane.f32.xlu0 %v784
        %v786 = vpop.xlane.xlu0 %785
        %v787 = vrcp.pop %v786
        %v788 = vmul.f32 %v783, %v787
        %790 = vset.pattern.permute.xlu0 0
        %791 = vperm.xlu0 %790, %v788
        %v792 = vpop.permute.xlu0 %791
        %v794 = vmul.f32 %v686, %v792
        %795 = vset.pattern.permute.xlu0 1
        %796 = vperm.xlu0 %795, %v788
        %v797 = vpop.permute.xlu0 %796
        %v799 = vmul.f32 %v697, %v797
        %800 = vset.pattern.permute.xlu0 2
        %801 = vperm.xlu0 %800, %v788
        %v802 = vpop.permute.xlu0 %801
        %v804 = vmul.f32 %v707, %v802
        %805 = vset.pattern.permute.xlu0 3
        %806 = vperm.xlu0 %805, %v788
        %v807 = vpop.permute.xlu0 %806
        %v809 = vmul.f32 %v717, %v807
        %810 = vset.pattern.permute.xlu0 4
        %811 = vperm.xlu0 %810, %v788
        %v812 = vpop.permute.xlu0 %811
        %v814 = vmul.f32 %v727, %v812
        %815 = vset.pattern.permute.xlu0 5
        %816 = vperm.xlu0 %815, %v788
        %v817 = vpop.permute.xlu0 %816
        %v819 = vmul.f32 %v737, %v817
        %820 = vset.pattern.permute.xlu0 6
        %821 = vperm.xlu0 %820, %v788
        %v822 = vpop.permute.xlu0 %821
        %v824 = vmul.f32 %v747, %v822
        %825 = vset.pattern.permute.xlu0 7
        %826 = vperm.xlu0 %825, %v788
        %v827 = vpop.permute.xlu0 %826
        %v829 = vmul.f32 %v757, %v827
        %v830 = vadd.f32 %v794, %v799
        %v831 = vadd.f32 %v804, %v809
        %v832 = vadd.f32 %v814, %v819
        %v833 = vadd.f32 %v824, %v829
        %v834 = vadd.f32 %v830, %v831
        %v835 = vadd.f32 %v832, %v833
        %v836 = vadd.f32 %v834, %v835
        %v838 = vsel %vm688, %v836, 0
        %840 = vmatprep.subr.mxu0 0.0
        %841 = vmatpush1.msra.mxu0 0.0
        %842 = vmatprep.subr.mxu0 0.0
        %843 = vmatpush1.msra.mxu0 0.0
        %844 = vmatprep.subr.mxu0 0.0
        %845 = vmatpush1.msra.mxu0 0.0
        %846 = vmatprep.subr.mxu0 0.0
        %847 = vmatpush1.msra.mxu0 0.0
        %848 = vmatprep.subr.mxu0 0.0
        %849 = vmatpush1.msra.mxu0 0.0
        %850 = vmatprep.subr.mxu0 0.0
        %851 = vmatpush1.msra.mxu0 0.0
        %852 = vmatprep.subr.mxu0 0.0
        %853 = vmatpush1.msra.mxu0 0.0
        %854 = vmatprep.subr.mxu0 0.0
        %855 = vmatpush1.msra.mxu0 0.0
        %856 = vmatprep.subr.mxu0 0.0
        %857 = vmatpush1.msra.mxu0 0.0
        %858 = vmatprep.subr.mxu0 0.0
        %859 = vmatpush1.msra.mxu0 0.0
        %860 = vmatprep.subr.mxu0 0.0
        %861 = vmatpush1.msra.mxu0 0.0
        %862 = vmatprep.subr.mxu0 0.0
        %863 = vmatpush1.msra.mxu0 0.0
        %864 = vmatprep.subr.mxu0 0.0
        %865 = vmatpush1.msra.mxu0 0.0
        %866 = vmatprep.subr.mxu0 0.0
        %867 = vmatpush1.msra.mxu0 0.0
        %868 = vmatprep.subr.mxu0 0.0
        %869 = vmatpush1.msra.mxu0 %v602
        %870 = vmatprep.subr.mxu0 0.0
        %871 = vmatpush1.msra.mxu0 %v597
        %872 = vmatprep.subr.mxu0 0.0
        %873 = vmatpush2.msra.mxu0 0.0
        %874 = vmatprep.subr.mxu0 0.0
        %875 = vmatpush2.msra.mxu0 0.0
        %876 = vmatprep.subr.mxu0 0.0
        %877 = vmatpush2.msra.mxu0 0.0
        %878 = vmatprep.subr.mxu0 0.0
        %879 = vmatpush2.msra.mxu0 0.0
        %880 = vmatprep.subr.mxu0 0.0
        %881 = vmatpush2.msra.mxu0 0.0
        %882 = vmatprep.subr.mxu0 0.0
        %883 = vmatpush2.msra.mxu0 0.0
        %884 = vmatprep.subr.mxu0 0.0
        %885 = vmatpush2.msra.mxu0 0.0
        %886 = vmatprep.subr.mxu0 0.0
        %887 = vmatpush2.msra.mxu0 0.0
        %888 = vmatprep.subr.mxu0 0.0
        %889 = vmatpush2.msra.mxu0 0.0
        %890 = vmatprep.subr.mxu0 0.0
        %891 = vmatpush2.msra.mxu0 0.0
        %892 = vmatprep.subr.mxu0 0.0
        %893 = vmatpush2.msra.mxu0 0.0
        %894 = vmatprep.subr.mxu0 0.0
        %895 = vmatpush2.msra.mxu0 0.0
        %896 = vmatprep.subr.mxu0 0.0
        %897 = vmatpush2.msra.mxu0 0.0
        %898 = vmatprep.subr.mxu0 0.0
        %899 = vmatpush2.msra.mxu0 0.0
        %900 = vmatprep.subr.mxu0 0.0
        %901 = vmatpush2.msra.mxu0 0.0
        %902 = vmatprep.subr.mxu0 0.0
        %903 = vmatpush2.msra.mxu0 0.0
        %904 = vmatprep.mubr.f32.mxu0 0.0
        %905 = vmatmul.mubr.f32.gmra.mxu0 %v838
        %v906 = vpop.f32.mrf.mxu0
        %v907 = vadd.f32 0.0, %v906
        %v908 = vpop.f32.mrf.mxu0
        %909 = vdwg.mxu0
        %s910 = scalar_lea.vmem %s5, 8
        %v911 = vld [vmem:[%s910] sm:$0xff]
        %v912 = vld [vmem:[%s6] sm:$0x1]
        %v913 = vlaneseq
        %v914 = vshrl.u32 %v913, 7
        %v915 = vsub.s32 0, %v914
        %v916 = vrot.slane %v912, %v915
        %v918 = vsel %vm523, %v907, 0
        %920 = vmatprep.subr.mxu0 0.0
        %921 = vmatpush1.msra.mxu0 0.0
        %922 = vmatprep.subr.mxu0 0.0
        %923 = vmatpush1.msra.mxu0 0.0
        %924 = vmatprep.subr.mxu0 0.0
        %925 = vmatpush1.msra.mxu0 0.0
        %926 = vmatprep.subr.mxu0 0.0
        %927 = vmatpush1.msra.mxu0 0.0
        %928 = vmatprep.subr.mxu0 0.0
        %929 = vmatpush1.msra.mxu0 0.0
        %930 = vmatprep.subr.mxu0 0.0
        %931 = vmatpush1.msra.mxu0 0.0
        %932 = vmatprep.subr.mxu0 0.0
        %933 = vmatpush1.msra.mxu0 0.0
        %934 = vmatprep.subr.mxu0 0.0
        %935 = vmatpush1.msra.mxu0 0.0
        %936 = vmatprep.subr.mxu0 0.0
        %937 = vmatpush1.msra.mxu0 0.0
        %938 = vmatprep.subr.mxu0 0.0
        %939 = vmatpush1.msra.mxu0 0.0
        %940 = vmatprep.subr.mxu0 0.0
        %941 = vmatpush1.msra.mxu0 0.0
        %942 = vmatprep.subr.mxu0 0.0
        %943 = vmatpush1.msra.mxu0 0.0
        %944 = vmatprep.subr.mxu0 0.0
        %945 = vmatpush1.msra.mxu0 0.0
        %946 = vmatprep.subr.mxu0 0.0
        %947 = vmatpush1.msra.mxu0 0.0
        %948 = vmatprep.subr.mxu0 0.0
        %949 = vmatpush1.msra.mxu0 0.0
        %950 = vmatprep.subr.mxu0 0.0
        %951 = vmatpush1.msra.mxu0 %v911
        %952 = vmatprep.subr.mxu0 0.0
        %953 = vmatpush2.msra.mxu0 0.0
        %954 = vmatprep.subr.mxu0 0.0
        %955 = vmatpush2.msra.mxu0 0.0
        %956 = vmatprep.subr.mxu0 0.0
        %957 = vmatpush2.msra.mxu0 0.0
        %958 = vmatprep.subr.mxu0 0.0
        %959 = vmatpush2.msra.mxu0 0.0
        %960 = vmatprep.subr.mxu0 0.0
        %961 = vmatpush2.msra.mxu0 0.0
        %962 = vmatprep.subr.mxu0 0.0
        %963 = vmatpush2.msra.mxu0 0.0
        %964 = vmatprep.subr.mxu0 0.0
        %965 = vmatpush2.msra.mxu0 0.0
        %966 = vmatprep.subr.mxu0 0.0
        %967 = vmatpush2.msra.mxu0 0.0
        %968 = vmatprep.subr.mxu0 0.0
        %969 = vmatpush2.msra.mxu0 0.0
        %970 = vmatprep.subr.mxu0 0.0
        %971 = vmatpush2.msra.mxu0 0.0
        %972 = vmatprep.subr.mxu0 0.0
        %973 = vmatpush2.msra.mxu0 0.0
        %974 = vmatprep.subr.mxu0 0.0
        %975 = vmatpush2.msra.mxu0 0.0
        %976 = vmatprep.subr.mxu0 0.0
        %977 = vmatpush2.msra.mxu0 0.0
        %978 = vmatprep.subr.mxu0 0.0
        %979 = vmatpush2.msra.mxu0 0.0
        %980 = vmatprep.subr.mxu0 0.0
        %981 = vmatpush2.msra.mxu0 0.0
        %982 = vmatprep.subr.mxu0 0.0
        %983 = vmatpush2.msra.mxu0 0.0
        %984 = vmatprep.mubr.f32.mxu0 0.0
        %985 = vmatmul.mubr.f32.gmra.mxu0 %v918
        %v986 = vpop.f32.mrf.mxu0
        %v987 = vadd.f32 %v916, %v986
        %v988 = vpop.f32.mrf.mxu0
        %989 = vdwg.mxu0
        %v990 = vadd.f32 %v987, %v335
        %v991 = vsel %vm523, %v990, 0.0
        %992 = vadd.xlane.f32.xlu0 %v991
        %v993 = vpop.xlane.xlu0 %992
        %v994 = vrcp.pop 8.0
        %v995 = vmul.f32 %v993, %v994
        %v996 = vsub.f32 %v990, %v995
        %v997 = vmul.f32 %v996, %v996
        %v998 = vsel %vm523, %v997, 0.0
        %999 = vadd.xlane.f32.xlu0 %v998
        %v1000 = vpop.xlane.xlu0 %999
        %v1001 = vmul.f32 %v1000, %v994
        %v1002 = vadd.f32 %v1001, 1e-05
        %v1003 = vrsqrt.pop %v1002
        %v1004 = vmul.f32 %v996, %v1003
        %v1005 = vld [vmem:[%s6 + $0x1] sm:$0x1]
        %v1006 = vlaneseq
        %v1007 = vshrl.u32 %v1006, 7
        %v1008 = vsub.s32 0, %v1007
        %v1009 = vrot.slane %v1005, %v1008
        %v1010 = vmul.f32 %v1004, %v1009
        %v1011 = vld [vmem:[%s6 + $0x2] sm:$0x1]
        %v1012 = vlaneseq
        %v1013 = vshrl.u32 %v1012, 7
        %v1014 = vsub.s32 0, %v1013
        %v1015 = vrot.slane %v1011, %v1014
        %v1016 = vadd.f32 %v1010, %v1015
        %1017 = vrot.lane.b32.xlu0 %v788, 8
        %v1018 = vpop.permute.xlu0 %1017
        %v1020 = vsel %vm523, %v1016, %v1018
        %v1021 = vsel %vm688, %v1020, 0.0
        %1022 = vst [vmem:[%s314] sm:$0xff] %v1021
        %s1023 = sand.u32 %s196, 1
        %s1024 = scalar_lea.sflag [#allocation3], %s1023
        %s1025 = sand.u32 %s196, 1
        %s1026 = smul.addr %s1025, 8
        %s1027 = scalar_lea.vmem [#allocation2], %s1026
        // Predicated region
        $region49: #{tpu_custom_call.1} parent=47 // pred_check
          %p1028 = pneg %p206
        $region50: #{tpu_custom_call.1} parent=47 // pred_check_branch
          %1030 = sbr.rel (%p1028) target = $region52
        $region51: #{tpu_custom_call.1} parent=47 // pred_region
          %s1032 = ssub.s32 128, 128
          %1033 = vsyncadd %s1024, %s1032
          %s1034 = smul.addr %s21, 128
          %s1035 = scalar_lea.hbm %s7, %s1034
          %s1037 = sshll.u32 %s1027, 4
          %s1038 = int_to_ptr.vmem [resolvable:$true] %s1037
          %1040 = dma.vmem_to_hbm [thread:$0]  %s1038, 128, %s1035, %s1024
        $region52: #{tpu_custom_call.1} parent=47 // pred_fallthru
          _
      $region48: #{tpu_custom_call.1} parent=5 // pred_fallthru
        _
      %p1041 = scmp.le.s32.totalorder 2, %s16
      // Predicated region
      $region53: #{tpu_custom_call.1} parent=5 // pred_check
        %p1042 = pneg %p1041
      $region54: #{tpu_custom_call.1} parent=5 // pred_check_branch
        %1044 = sbr.rel (%p1042) target = $region56
      $region55: #{tpu_custom_call.1} parent=5 // pred_region
        %s1045 = ssub.s32 %s16, 2
        // Predicated region
        $region57: #{tpu_custom_call.1} parent=55 // pred_check
          %p1046 = pneg %p212
        $region58: #{tpu_custom_call.1} parent=55 // pred_check_branch
          %1048 = sbr.rel (%p1046) target = $region60
        $region59: #{tpu_custom_call.1} parent=55 // pred_region
          %s1049 = sand.u32 %s197, 1
          %s1050 = scalar_lea.sflag [#allocation3], %s1049
          %s1051 = sand.u32 %s197, 1
          %s1052 = smul.addr %s1051, 8
          %s1053 = scalar_lea.vmem [#allocation2], %s1052
          %1054 = dma.done %s1050, 128
        $region60: #{tpu_custom_call.1} parent=55 // pred_fallthru
          _
      $region56: #{tpu_custom_call.1} parent=5 // pred_fallthru
        _
    $region6: #{tpu_custom_call.1} parent=1 // loop_footer
      %s20 = sadd.s32 1, %s16
    $region7: #{tpu_custom_call.1} parent=1 // loop_footer_branch
      %15 = sbr.rel target = $region3
    $region8: #{tpu_custom_call.1} parent=1 // loop_exit
      _
    %1055 = vsyncpa [#allocation3], 1
    %s1056 = scalar_lea.sflag [#allocation3], 1
    %1057 = vsyncpa %s1056, 1

</llo_original>
